<compile_context>
chip_gen: v7x
topology: tpu7x:2x2x1
jax: 0.10.0
libtpu: 0.0.40
codegen_flags: <defaults>
</compile_context>

<pallas_src>
import math

import jax
import jax.numpy as jnp
from jax.experimental import pallas as pl
from jax.experimental.pallas import tpu as pltpu

_LANE = 128
_SUB = 8
_TILE_ROWS = 4096     # 4096*128*4B = 2 MiB per f32 input buffer (double-buffered)
_CORE_SPLITS = 2      # leading "parallel" grid axis; exploits v7x's 2 TensorCores


# ---------------------------------------------------------------------------
# Kernel factories (close over static tiling parameters).
# ---------------------------------------------------------------------------
def _make_sq_err_sum_kernel(rows, tile_rows, steps, needs_mask):
    """Accumulates sum((x - y)^2) over the inner grid axis into an (8,128) partial."""
    assert tile_rows % _SUB == 0

    def kernel(x_ref, y_ref, o_ref, acc_ref):
        i = pl.program_id(1)

        @pl.when(i == 0)
        def _init():
            acc_ref[...] = jnp.zeros_like(acc_ref)

        d = x_ref[...].astype(jnp.float32) - y_ref[...].astype(jnp.float32)
        if needs_mask:
            row0 = (pl.program_id(0) * steps + i) * tile_rows
            rid = jax.lax.broadcasted_iota(jnp.int32, (tile_rows, _LANE), 0)
            d = jnp.where(row0 + rid < rows, d, 0.0)
        v = d * d
        # Fold the tile into the vreg-shaped accumulator: pure VPU adds.
        acc_ref[...] += v.reshape(tile_rows // _SUB, _SUB, _LANE).sum(axis=0)

        @pl.when(i == steps - 1)
        def _fin():
            o_ref[...] = acc_ref[...]

    return kernel


def _make_log_sum_kernel(rows, tile_rows, steps, needs_mask):
    """Accumulates sum(log(l)) over the inner grid axis into an (8,128) partial."""
    assert tile_rows % _SUB == 0

    def kernel(l_ref, o_ref, acc_ref):
        i = pl.program_id(1)

        @pl.when(i == 0)
        def _init():
            acc_ref[...] = jnp.zeros_like(acc_ref)

        l = l_ref[...].astype(jnp.float32)
        if needs_mask:
            row0 = (pl.program_id(0) * steps + i) * tile_rows
            rid = jax.lax.broadcasted_iota(jnp.int32, (tile_rows, _LANE), 0)
            l = jnp.where(row0 + rid < rows, l, 1.0)   # log(1) = 0 -> neutral
        v = jnp.log(l)
        acc_ref[...] += v.reshape(tile_rows // _SUB, _SUB, _LANE).sum(axis=0)

        @pl.when(i == steps - 1)
        def _fin():
            o_ref[...] = acc_ref[...]

    return kernel


# ---------------------------------------------------------------------------
# Wrapper glue.
# ---------------------------------------------------------------------------
def _round_up(x, m):
    return -(-x // m) * m


def _flat_to_slab(flat, fill_value):
    """View a flat 1-D array as a lane-dense (rows, 128) slab in its native dtype.

    The common case (numel % 128 == 0 and either large or 8-row aligned) is a free
    reshape of the contiguous buffer -- no HBM copy.  Otherwise a single minimal
    pad with a reduction-neutral value is emitted (small / odd-shaped tensors).
    """
    # TODO(synk): element-level in-kernel masking would also avoid the pad copy for
    # huge tensors whose numel is not a multiple of 128.
    n = flat.shape[0]
    rows = pl.cdiv(n, _LANE)
    if rows < _TILE_ROWS:
        rows = _round_up(rows, _SUB)      # keep single-tile slabs 8-row aligned
    total = rows * _LANE
    if total != n:
        flat = jnp.pad(flat, (0, total - n), constant_values=fill_value)
    return flat.reshape(rows, _LANE)


def _reduce_call(make_kernel, *slabs):
    rows = slabs[0].shape[0]
    tile_rows = min(_TILE_ROWS, rows)
    num_tiles = pl.cdiv(rows, tile_rows)
    num_splits = _CORE_SPLITS if num_tiles >= _CORE_SPLITS else 1
    steps = pl.cdiv(num_tiles, num_splits)
    # Masking is needed whenever the (split x step) tiling over-covers the slab.
    needs_mask = num_splits * steps * tile_rows > rows

    if num_splits * steps == num_tiles:
        def in_idx(c, i):
            return (c * steps + i, 0)
    else:
        # The split tail over-runs the tile range; clamp to the last valid tile
        # (its contribution is fully masked out inside the kernel).
        def in_idx(c, i):
            return (jnp.minimum(c * steps + i, num_tiles - 1), 0)

    out = pl.pallas_call(
        make_kernel(rows, tile_rows, steps, needs_mask),
        out_shape=jax.ShapeDtypeStruct((num_splits * _SUB, _LANE), jnp.float32),
        grid_spec=pltpu.PrefetchScalarGridSpec(
            num_scalar_prefetch=0,
            grid=(num_splits, steps),
            in_specs=[pl.BlockSpec((tile_rows, _LANE), in_idx) for _ in slabs],
            out_specs=pl.BlockSpec((_SUB, _LANE), lambda c, i: (c, 0)),
            scratch_shapes=[pltpu.VMEM((_SUB, _LANE), jnp.float32)],
        ),
        compiler_params=pltpu.CompilerParams(
            dimension_semantics=("parallel", "arbitrary")),
    )(*slabs)
    # Tiny final reduce (<= num_splits * 1024 elements) in the wrapper.
    return jnp.sum(out)


def sum_squared_error(x_hat, target):
    return _reduce_call(_make_sq_err_sum_kernel,
                        _flat_to_slab(jnp.ravel(x_hat), 0.0),
                        _flat_to_slab(jnp.ravel(target), 0.0))


def sum_log_fused(likelihood_list):
    flats = [jnp.ravel(l) for l in likelihood_list]
    flat = flats[0] if len(flats) == 1 else jnp.concatenate(flats)
    return _reduce_call(_make_log_sum_kernel, _flat_to_slab(flat, 1.0))


# ---------------------------------------------------------------------------
# RateDistortionLoss forward (matches the PyTorch module semantics exactly).
# ---------------------------------------------------------------------------
def rate_distortion_loss(output, target, lmbda=0.01):
    N, _, H, W = target.shape
    num_pixels = N * H * W

    lik_list = list(output["likelihoods"].values())
    if lik_list:
        # Single fused launch over all likelihood tensors.
        bpp_loss = sum_log_fused(lik_list) / (-math.log(2) * num_pixels)
    else:
        bpp_loss = jnp.float32(0.0)

    n_elems = math.prod(output["x_hat"].shape)
    mse_loss = sum_squared_error(output["x_hat"], target) / jnp.float32(n_elems)

    loss = lmbda * (255.0 ** 2) * mse_loss + bpp_loss
    return {"bpp_loss": bpp_loss, "mse_loss": mse_loss, "loss": loss}


# ---------------------------------------------------------------------------
# Demo / self-check.
# ---------------------------------------------------------------------------
if __name__ == "__main__":
    key = jax.random.PRNGKey(0)
    k_t, k_x, k_ly, k_lz, k_a, k_b = jax.random.split(key, 6)

    # Small NCHW shapes consistent with a compression model's loss inputs.
    N, C, H, W = 2, 4, 16, 16
    target = jax.random.uniform(k_t, (N, C, H, W), dtype=jnp.float32)
    x_hat = target + 0.05 * jax.random.normal(k_x, (N, C, H, W), dtype=jnp.float32)

    # Two likelihood tensors ("y" and "z"), values strictly in (0, 1].
    lik_y = jax.random.uniform(k_ly, (N, 8, H // 4, W // 4),
                               dtype=jnp.float32, minval=1e-3, maxval=1.0)
    lik_z = jax.random.uniform(k_lz, (N, 4, H // 8, W // 8),
                               dtype=jnp.float32, minval=1e-3, maxval=1.0)

    output = {"x_hat": x_hat, "likelihoods": {"y": lik_y, "z": lik_z}}

    loss_fn = jax.jit(lambda o, t: rate_distortion_loss(o, t, lmbda=0.01))
    out = loss_fn(output, target)
    out = jax.tree_util.tree_map(jax.block_until_ready, out)

    # Pure-JAX reference check.
    num_pixels = N * H * W
    ref_bpp = (jnp.sum(jnp.log(lik_y)) + jnp.sum(jnp.log(lik_z))) / (
        -math.log(2) * num_pixels)
    ref_mse = jnp.mean((x_hat - target) ** 2)
    ref_loss = 0.01 * 255.0 ** 2 * ref_mse + ref_bpp

    assert jnp.allclose(out["bpp_loss"], ref_bpp, rtol=1e-5, atol=1e-5)
    assert jnp.allclose(out["mse_loss"], ref_mse, rtol=1e-5, atol=1e-6)
    assert jnp.allclose(out["loss"], ref_loss, rtol=1e-5, atol=1e-5)

    # Second check: exercises the multi-tile grid, the 2-way core split, the
    # ragged last tile and the clamped duplicate tile of the split tail.
    big = (2, 3, 512, 384)          # 1_179_648 elems -> 9216 rows -> 3 tiles of 4096
    a = jax.random.uniform(k_a, big, dtype=jnp.float32)
    b = a + 0.1 * jax.random.normal(k_b, big, dtype=jnp.float32)
    got = jax.block_until_ready(sum_squared_error(a, b))
    ref = jax.block_until_ready(jnp.sum((a - b) ** 2))
    assert jnp.allclose(got, ref, rtol=1e-4, atol=1e-2), (got, ref)

    print("KERNEL_OK")
</pallas_src>

<mosaic_0001>
module attributes {stable_mosaic.version = 11 : i64} {
  func.func @kernel(%arg0: i32, %arg1: i32, %arg2: memref<8x128xf32, #tpu.memory_space<vmem>>, %arg3: memref<8x128xf32, #tpu.memory_space<vmem>>, %arg4: memref<8x128xf32, #tpu.memory_space<vmem>>) attributes {dimension_semantics = [#tpu.dimension_semantics<parallel>, #tpu.dimension_semantics<arbitrary>], iteration_bounds = array<i64: 1, 1>, scalar_prefetch = 0 : i64, scratch_operands = 1 : i64, tpu.core_type = #tpu.core_type<tc>, window_params = [{transform_indices = @transform_0, window_bounds = array<i64: 8, 128>}, {transform_indices = @transform_1, window_bounds = array<i64: 8, 128>}]} {
    %c0_i32 = arith.constant 0 : i32
    %0 = arith.cmpi eq, %arg1, %c0_i32 : i32
    %1 = arith.extui %0 : i1 to i32
    %c0_i32_0 = arith.constant 0 : i32
    %2 = arith.cmpi ne, %1, %c0_i32_0 : i32
    scf.if %2 {
      %cst_8 = arith.constant 0.000000e+00 : f32
      %13 = vector.broadcast %cst_8 : f32 to vector<8x128xf32>
      %c0_9 = arith.constant 0 : index
      %c0_10 = arith.constant 0 : index
      %14 = vector.load %arg4[%c0_9, %c0_10] : memref<8x128xf32, #tpu.memory_space<vmem>>, vector<8x128xf32>
      tpu.vector_store %arg4[%c0_9, %c0_10], %13 {strides = array<i32>} : memref<8x128xf32, #tpu.memory_space<vmem>>, vector<8x128xf32>,
    } else {
    }
    %c0 = arith.constant 0 : index
    %c0_1 = arith.constant 0 : index
    %3 = vector.load %arg2[%c0, %c0_1] : memref<8x128xf32, #tpu.memory_space<vmem>>, vector<8x128xf32>
    %4 = math.log %3 : vector<8x128xf32>
    %c0_2 = arith.constant 0 : index
    %c0_3 = arith.constant 0 : index
    %5 = vector.load %arg4[%c0_2, %c0_3] : memref<8x128xf32, #tpu.memory_space<vmem>>, vector<8x128xf32>
    %6 = vector.shape_cast %4 : vector<8x128xf32> to vector<1x8x128xf32>
    %cst = arith.constant dense<0.000000e+00> : vector<8x128xf32>
    %7 = vector.multi_reduction <add>, %6, %cst [0] : vector<1x8x128xf32> to vector<8x128xf32>
    %8 = arith.addf %5, %7 : vector<8x128xf32>
    %c0_4 = arith.constant 0 : index
    %c0_5 = arith.constant 0 : index
    %9 = vector.load %arg4[%c0_4, %c0_5] : memref<8x128xf32, #tpu.memory_space<vmem>>, vector<8x128xf32>
    tpu.vector_store %arg4[%c0_4, %c0_5], %8 {strides = array<i32>} : memref<8x128xf32, #tpu.memory_space<vmem>>, vector<8x128xf32>,
    %c0_i32_6 = arith.constant 0 : i32
    %10 = arith.cmpi eq, %arg1, %c0_i32_6 : i32
    %11 = arith.extui %10 : i1 to i32
    %c0_i32_7 = arith.constant 0 : i32
    %12 = arith.cmpi ne, %11, %c0_i32_7 : i32
    scf.if %12 {
      %c0_8 = arith.constant 0 : index
      %c0_9 = arith.constant 0 : index
      %13 = vector.load %arg4[%c0_8, %c0_9] : memref<8x128xf32, #tpu.memory_space<vmem>>, vector<8x128xf32>
      %c0_10 = arith.constant 0 : index
      %c0_11 = arith.constant 0 : index
      %14 = vector.load %arg3[%c0_10, %c0_11] : memref<8x128xf32, #tpu.memory_space<vmem>>, vector<8x128xf32>
      tpu.vector_store %arg3[%c0_10, %c0_11], %13 {strides = array<i32>} : memref<8x128xf32, #tpu.memory_space<vmem>>, vector<8x128xf32>,
    } else {
    }
    return
  }
  func.func @transform_0(%arg0: i32, %arg1: i32) -> (i32, i32) {
    %c1_i32 = arith.constant 1 : i32
    %0 = arith.muli %arg0, %c1_i32 : i32
    %1 = arith.addi %0, %arg1 : i32
    %c0_i32 = arith.constant 0 : i32
    %c0_i32_0 = arith.constant 0 : i32
    return %1, %c0_i32 : i32, i32
  }
  func.func @transform_1(%arg0: i32, %arg1: i32) -> (i32, i32) {
    %c0_i32 = arith.constant 0 : i32
    %c0_i32_0 = arith.constant 0 : i32
    return %arg0, %c0_i32 : i32, i32
  }
}

module attributes {stable_mosaic.version = 11 : i64} {
  func.func @kernel(%arg0: i32, %arg1: i32, %arg2: memref<16x128xf32, #tpu.memory_space<vmem>>, %arg3: memref<16x128xf32, #tpu.memory_space<vmem>>, %arg4: memref<8x128xf32, #tpu.memory_space<vmem>>, %arg5: memref<8x128xf32, #tpu.memory_space<vmem>>) attributes {dimension_semantics = [#tpu.dimension_semantics<parallel>, #tpu.dimension_semantics<arbitrary>], iteration_bounds = array<i64: 1, 1>, scalar_prefetch = 0 : i64, scratch_operands = 1 : i64, tpu.core_type = #tpu.core_type<tc>, window_params = [{transform_indices = @transform_0, window_bounds = array<i64: 16, 128>}, {transform_indices = @transform_1, window_bounds = array<i64: 16, 128>}, {transform_indices = @transform_2, window_bounds = array<i64: 8, 128>}]} {
    %c0_i32 = arith.constant 0 : i32
    %0 = arith.cmpi eq, %arg1, %c0_i32 : i32
    %1 = arith.extui %0 : i1 to i32
    %c0_i32_0 = arith.constant 0 : i32
    %2 = arith.cmpi ne, %1, %c0_i32_0 : i32
    scf.if %2 {
      %cst_10 = arith.constant 0.000000e+00 : f32
      %15 = vector.broadcast %cst_10 : f32 to vector<8x128xf32>
      %c0_11 = arith.constant 0 : index
      %c0_12 = arith.constant 0 : index
      %16 = vector.load %arg5[%c0_11, %c0_12] : memref<8x128xf32, #tpu.memory_space<vmem>>, vector<8x128xf32>
      tpu.vector_store %arg5[%c0_11, %c0_12], %15 {strides = array<i32>} : memref<8x128xf32, #tpu.memory_space<vmem>>, vector<8x128xf32>,
    } else {
    }
    %c0 = arith.constant 0 : index
    %c0_1 = arith.constant 0 : index
    %3 = vector.load %arg2[%c0, %c0_1] : memref<16x128xf32, #tpu.memory_space<vmem>>, vector<16x128xf32>
    %c0_2 = arith.constant 0 : index
    %c0_3 = arith.constant 0 : index
    %4 = vector.load %arg3[%c0_2, %c0_3] : memref<16x128xf32, #tpu.memory_space<vmem>>, vector<16x128xf32>
    %5 = arith.subf %3, %4 : vector<16x128xf32>
    %6 = arith.mulf %5, %5 : vector<16x128xf32>
    %c0_4 = arith.constant 0 : index
    %c0_5 = arith.constant 0 : index
    %7 = vector.load %arg5[%c0_4, %c0_5] : memref<8x128xf32, #tpu.memory_space<vmem>>, vector<8x128xf32>
    %8 = vector.shape_cast %6 : vector<16x128xf32> to vector<2x8x128xf32>
    %cst = arith.constant dense<0.000000e+00> : vector<8x128xf32>
    %9 = vector.multi_reduction <add>, %8, %cst [0] : vector<2x8x128xf32> to vector<8x128xf32>
    %10 = arith.addf %7, %9 : vector<8x128xf32>
    %c0_6 = arith.constant 0 : index
    %c0_7 = arith.constant 0 : index
    %11 = vector.load %arg5[%c0_6, %c0_7] : memref<8x128xf32, #tpu.memory_space<vmem>>, vector<8x128xf32>
    tpu.vector_store %arg5[%c0_6, %c0_7], %10 {strides = array<i32>} : memref<8x128xf32, #tpu.memory_space<vmem>>, vector<8x128xf32>,
    %c0_i32_8 = arith.constant 0 : i32
    %12 = arith.cmpi eq, %arg1, %c0_i32_8 : i32
    %13 = arith.extui %12 : i1 to i32
    %c0_i32_9 = arith.constant 0 : i32
    %14 = arith.cmpi ne, %13, %c0_i32_9 : i32
    scf.if %14 {
      %c0_10 = arith.constant 0 : index
      %c0_11 = arith.constant 0 : index
      %15 = vector.load %arg5[%c0_10, %c0_11] : memref<8x128xf32, #tpu.memory_space<vmem>>, vector<8x128xf32>
      %c0_12 = arith.constant 0 : index
      %c0_13 = arith.constant 0 : index
      %16 = vector.load %arg4[%c0_12, %c0_13] : memref<8x128xf32, #tpu.memory_space<vmem>>, vector<8x128xf32>
      tpu.vector_store %arg4[%c0_12, %c0_13], %15 {strides = array<i32>} : memref<8x128xf32, #tpu.memory_space<vmem>>, vector<8x128xf32>,
    } else {
    }
    return
  }
  func.func @transform_0(%arg0: i32, %arg1: i32) -> (i32, i32) {
    %c1_i32 = arith.constant 1 : i32
    %0 = arith.muli %arg0, %c1_i32 : i32
    %1 = arith.addi %0, %arg1 : i32
    %c0_i32 = arith.constant 0 : i32
    %c0_i32_0 = arith.constant 0 : i32
    return %1, %c0_i32 : i32, i32
  }
  func.func @transform_1(%arg0: i32, %arg1: i32) -> (i32, i32) {
    %c1_i32 = arith.constant 1 : i32
    %0 = arith.muli %arg0, %c1_i32 : i32
    %1 = arith.addi %0, %arg1 : i32
    %c0_i32 = arith.constant 0 : i32
    %c0_i32_0 = arith.constant 0 : i32
    return %1, %c0_i32 : i32, i32
  }
  func.func @transform_2(%arg0: i32, %arg1: i32) -> (i32, i32) {
    %c0_i32 = arith.constant 0 : i32
    %c0_i32_0 = arith.constant 0 : i32
    return %arg0, %c0_i32 : i32, i32
  }
}

</mosaic_0001>

<llo_original>
// kernel: _lambda_.2
$region0: #{_lambda_.2}
  #allocation0 [shape = 'u32[]', space=smem, size = 0x4, offset = 0x4, fixed_abs, tag = 'smem constant byte address 0x4 - core index']
  #allocation1 [shape = 'u32[144,128]{1,0:T(1,128)}', space=vmem, size = 0x12000, scoped, tag = 'internal scratch']
  #allocation2 [shape = 'f32[8,128]{1,0:T(8,128)}', space=vmem, size = 0x1000, scoped, tag = 'scratch operand']
  %s0 = inlined_call_operand.vmem [shape: f32[8,128], index: 0, kind: input, shape index: {}]
  %s1 = inlined_call_operand.vmem [shape: f32[8,128], index: 1, kind: output, shape index: {}]
  %s2 = sld [smem:[#allocation0]]
  $region22: #{_lambda_.2} parent=0
    _
  %s4 = ssub.s32 1, %s2
  %s5 = scalar_select 0, %s4, %s2
  // Predicated region
  $region2: #{_lambda_.2} parent=0 // pred_check
    _
  $region3: #{_lambda_.2} parent=0 // pred_check_branch
    %7 = sbr.rel (0) target = $region5
  $region4: #{_lambda_.2} parent=0 // pred_region
    %s8 = sadd.s32 0, 0
    %p9 = scmp.lt.s32.totalorder %s8, 0
    %s10 = scalar_select %p9, %s8, 0
    %s11 = smul.addr %s10, 8
    %s12 = scalar_lea.vmem %s0, %s11
    %s13 = sadd.s32 0, 0
  $region5: #{_lambda_.2} parent=0 // pred_fallthru
    _
  %s14 = sadd.s32 0, 0
  %p15 = scmp.lt.s32.totalorder %s14, 0
  %s16 = scalar_select %p15, %s14, 0
  %s17 = smul.addr %s16, 8
  %s18 = scalar_lea.vmem %s0, %s17
  %s19 = sadd.s32 0, 0
  %p20 = scmp.lt.s32.totalorder %s19, 0
  %s21 = scalar_select %p20, %s19, 0
  %s22 = smul.addr %s21, 8
  %s23 = scalar_lea.vmem %s0, %s22
  %s24 = sadd.s32 0, 0
  %p25 = scmp.eq.s32.totalorder 0, 0
  // Predicated region
  $region6: #{_lambda_.2} parent=0 // pred_check
    %p26 = pneg %p25
  $region7: #{_lambda_.2} parent=0 // pred_check_branch
    %28 = sbr.rel (%p26) target = $region9
  $region8: #{_lambda_.2} parent=0 // pred_region
    %29 = vst [vmem:[#allocation2] sm:$0xff] 0.0
  $region9: #{_lambda_.2} parent=0 // pred_fallthru
    _
  %v30 = vld [vmem:[%s23] sm:$0xff]
  %v31 = vlog2.pop %v30
  %v32 = vmul.f32 %v31, 0.6931472
  %v33 = vld [vmem:[#allocation2] sm:$0xff]
  %v34 = vadd.f32 %v32, 0.0
  %v35 = vadd.f32 %v33, %v34
  %36 = vst [vmem:[#allocation2] sm:$0xff] %v35
  // Predicated region
  $region10: #{_lambda_.2} parent=0 // pred_check
    %p37 = pneg %p25
  $region11: #{_lambda_.2} parent=0 // pred_check_branch
    %39 = sbr.rel (%p37) target = $region13
  $region12: #{_lambda_.2} parent=0 // pred_region
    %v40 = vld [vmem:[#allocation2] sm:$0xff]
    %41 = vst [vmem:[%s1] sm:$0xff] %v40
  $region13: #{_lambda_.2} parent=0 // pred_fallthru
    _
  // Predicated region
  $region14: #{_lambda_.2} parent=0 // pred_check
    _
  $region15: #{_lambda_.2} parent=0 // pred_check_branch
    %43 = sbr.rel (0) target = $region17
  $region16: #{_lambda_.2} parent=0 // pred_region
    _
  $region17: #{_lambda_.2} parent=0 // pred_fallthru
    _
  // Predicated region
  $region18: #{_lambda_.2} parent=0 // pred_check
    _
  $region19: #{_lambda_.2} parent=0 // pred_check_branch
    %45 = sbr.rel (0) target = $region21
  $region20: #{_lambda_.2} parent=0 // pred_region
    _
  $region21: #{_lambda_.2} parent=0 // pred_fallthru
    _

// kernel: _lambda_.3
$region0: #{_lambda_.3}
  #allocation0 [shape = 'u32[]', space=smem, size = 0x4, offset = 0x4, fixed_abs, tag = 'smem constant byte address 0x4 - core index']
  #allocation1 [shape = 'u32[144,128]{1,0:T(1,128)}', space=vmem, size = 0x12000, scoped, tag = 'internal scratch']
  #allocation2 [shape = 'f32[8,128]{1,0:T(8,128)}', space=vmem, size = 0x1000, scoped, tag = 'scratch operand']
  %s0 = inlined_call_operand.vmem [shape: f32[16,128], index: 0, kind: input, shape index: {}]
  %s1 = inlined_call_operand.vmem [shape: f32[16,128], index: 1, kind: input, shape index: {}]
  %s2 = inlined_call_operand.vmem [shape: f32[8,128], index: 2, kind: output, shape index: {}]
  %s3 = sld [smem:[#allocation0]]
  $region26: #{_lambda_.3} parent=0
    _
  %s5 = ssub.s32 1, %s3
  %s6 = scalar_select 0, %s5, %s3
  // Predicated region
  $region2: #{_lambda_.3} parent=0 // pred_check
    _
  $region3: #{_lambda_.3} parent=0 // pred_check_branch
    %8 = sbr.rel (0) target = $region5
  $region4: #{_lambda_.3} parent=0 // pred_region
    %s9 = sadd.s32 0, 0
    %s10 = smul.u32 2, %s9
    %p11 = scmp.lt.s32.totalorder %s10, 1
    %s12 = scalar_select %p11, %s10, 1
    %s13 = smul.addr %s12, 8
    %s14 = scalar_lea.vmem %s0, %s13
    %s15 = sadd.s32 0, 0
    %s16 = smul.u32 2, %s15
  $region5: #{_lambda_.3} parent=0 // pred_fallthru
    _
  // Predicated region
  $region6: #{_lambda_.3} parent=0 // pred_check
    _
  $region7: #{_lambda_.3} parent=0 // pred_check_branch
    %18 = sbr.rel (0) target = $region9
  $region8: #{_lambda_.3} parent=0 // pred_region
    %s19 = sadd.s32 0, 0
    %s20 = smul.u32 2, %s19
    %p21 = scmp.lt.s32.totalorder %s20, 1
    %s22 = scalar_select %p21, %s20, 1
    %s23 = smul.addr %s22, 8
    %s24 = scalar_lea.vmem %s1, %s23
    %s25 = sadd.s32 0, 0
    %s26 = smul.u32 2, %s25
  $region9: #{_lambda_.3} parent=0 // pred_fallthru
    _
  %s27 = sadd.s32 0, 0
  %s28 = smul.u32 2, %s27
  %p29 = scmp.lt.s32.totalorder %s28, 1
  %s30 = scalar_select %p29, %s28, 1
  %s31 = smul.addr %s30, 8
  %s32 = scalar_lea.vmem %s0, %s31
  %s33 = sadd.s32 0, 0
  %s34 = smul.u32 2, %s33
  %p35 = scmp.lt.s32.totalorder %s34, 1
  %s36 = scalar_select %p35, %s34, 1
  %s37 = smul.addr %s36, 8
  %s38 = scalar_lea.vmem %s1, %s37
  %s39 = sadd.s32 0, 0
  %s40 = smul.u32 2, %s39
  %p41 = scmp.lt.s32.totalorder %s40, 1
  %s42 = scalar_select %p41, %s40, 1
  %s43 = smul.addr %s42, 8
  %s44 = scalar_lea.vmem %s0, %s43
  %s45 = sadd.s32 0, 0
  %s46 = smul.u32 2, %s45
  %s47 = sadd.s32 0, 0
  %s48 = smul.u32 2, %s47
  %p49 = scmp.lt.s32.totalorder %s48, 1
  %s50 = scalar_select %p49, %s48, 1
  %s51 = smul.addr %s50, 8
  %s52 = scalar_lea.vmem %s1, %s51
  %s53 = sadd.s32 0, 0
  %s54 = smul.u32 2, %s53
  %p55 = scmp.eq.s32.totalorder 0, 0
  // Predicated region
  $region10: #{_lambda_.3} parent=0 // pred_check
    %p56 = pneg %p55
  $region11: #{_lambda_.3} parent=0 // pred_check_branch
    %58 = sbr.rel (%p56) target = $region13
  $region12: #{_lambda_.3} parent=0 // pred_region
    %59 = vst [vmem:[#allocation2] sm:$0xff] 0.0
  $region13: #{_lambda_.3} parent=0 // pred_fallthru
    _
  %v60 = vld [vmem:[%s44] sm:$0xff]
  %v61 = vld [vmem:[%s44 + $0x8] sm:$0xff]
  %v62 = vld [vmem:[%s52] sm:$0xff]
  %v63 = vld [vmem:[%s52 + $0x8] sm:$0xff]
  %v64 = vsub.f32 %v60, %v62
  %v65 = vsub.f32 %v61, %v63
  %v66 = vmul.f32 %v64, %v64
  %v67 = vmul.f32 %v65, %v65
  %v68 = vld [vmem:[#allocation2] sm:$0xff]
  %v69 = vadd.f32 %v66, %v67
  %v70 = vadd.f32 %v68, %v69
  %71 = vst [vmem:[#allocation2] sm:$0xff] %v70
  // Predicated region
  $region14: #{_lambda_.3} parent=0 // pred_check
    %p72 = pneg %p55
  $region15: #{_lambda_.3} parent=0 // pred_check_branch
    %74 = sbr.rel (%p72) target = $region17
  $region16: #{_lambda_.3} parent=0 // pred_region
    %v75 = vld [vmem:[#allocation2] sm:$0xff]
    %76 = vst [vmem:[%s2] sm:$0xff] %v75
  $region17: #{_lambda_.3} parent=0 // pred_fallthru
    _
  // Predicated region
  $region18: #{_lambda_.3} parent=0 // pred_check
    _
  $region19: #{_lambda_.3} parent=0 // pred_check_branch
    %78 = sbr.rel (0) target = $region21
  $region20: #{_lambda_.3} parent=0 // pred_region
    _
  $region21: #{_lambda_.3} parent=0 // pred_fallthru
    _
  // Predicated region
  $region22: #{_lambda_.3} parent=0 // pred_check
    _
  $region23: #{_lambda_.3} parent=0 // pred_check_branch
    %80 = sbr.rel (0) target = $region25
  $region24: #{_lambda_.3} parent=0 // pred_region
    _
  $region25: #{_lambda_.3} parent=0 // pred_fallthru
    _

</llo_original>
